<compile_context>
chip_gen: v6e
topology: v6e:2x2x1
jax: 0.10.0
libtpu: 0.0.40
codegen_flags: <defaults>
</compile_context>

<pallas_src>
import functools

import jax
import jax.numpy as jnp
from jax.experimental import pallas as pl
from jax.experimental.pallas import tpu as pltpu


# ---------------------------------------------------------------------------
# Fused Pallas kernels
# ---------------------------------------------------------------------------
def _decoder_gaussian_kernel(z_ref, eps_ref, w1_ref, w2_ref, w3_ref,
                             vecs_ref, b3_ref, out_ref, *, data_dim):
    """One batch-row tile: 3 matmuls (bf16 in, f32 acc) + folded BN/ReLU + reparam.

    Outputs x_sample | mu | logvar lane-concatenated into a single (tm, 3*D) store.
    """
    v = vecs_ref[...]                                   # (4, H) f32 packed BN params
    s1, t1 = v[0:1, :], v[1:2, :]
    s2, t2 = v[2:3, :], v[3:4, :]

    z16 = z_ref[...].astype(jnp.bfloat16)
    h = jnp.dot(z16, w1_ref[...], preferred_element_type=jnp.float32)
    h = jnp.maximum(h * s1 + t1, 0.0)                   # folded eval-BN + ReLU (f32)
    h = jnp.dot(h.astype(jnp.bfloat16), w2_ref[...],
                preferred_element_type=jnp.float32)
    h = jnp.maximum(h * s2 + t2, 0.0)
    o = jnp.dot(h.astype(jnp.bfloat16), w3_ref[...],    # single (H, 2D) head matmul
                preferred_element_type=jnp.float32) + b3_ref[...]

    mu = o[:, :data_dim]                                # static lane slices (one vreg)
    lv = o[:, data_dim:]
    xs = mu + jnp.exp(0.5 * lv) * eps_ref[...]          # reparameterize
    out_ref[...] = jnp.concatenate([xs, mu, lv], axis=1).astype(out_ref.dtype)


def _decoder_det_kernel(z_ref, w1_ref, w2_ref, w3_ref, vecs_ref, b3_ref, o_ref):
    v = vecs_ref[...]
    s1, t1 = v[0:1, :], v[1:2, :]
    s2, t2 = v[2:3, :], v[3:4, :]

    z16 = z_ref[...].astype(jnp.bfloat16)
    h = jnp.dot(z16, w1_ref[...], preferred_element_type=jnp.float32)
    h = jnp.maximum(h * s1 + t1, 0.0)
    h = jnp.dot(h.astype(jnp.bfloat16), w2_ref[...],
                preferred_element_type=jnp.float32)
    h = jnp.maximum(h * s2 + t2, 0.0)
    o = jnp.dot(h.astype(jnp.bfloat16), w3_ref[...],
                preferred_element_type=jnp.float32) + b3_ref[...]
    o_ref[...] = o.astype(o_ref.dtype)


# ---------------------------------------------------------------------------
# Tile choice
# ---------------------------------------------------------------------------
def _round_up(x, m):
    return ((x + m - 1) // m) * m


def _pick_tile(batch, tile_m):
    """Full batch in one block when tiny; >=2 programs (mult. of 8 rows) when B>=16
    so v7x megacore can shard the 'parallel' batch axis; cap at tile_m."""
    if batch < 16:
        return batch
    if batch <= tile_m:
        return min(tile_m, _round_up(-(-batch // 2), 8))
    return tile_m


# ---------------------------------------------------------------------------
# Wrappers (single pallas_call each)
# ---------------------------------------------------------------------------
def decoder_mlp_gaussian(fp, z, eps, *, tile_m=512):
    B, L = z.shape
    H = fp["w1"].shape[1]
    D2 = fp["w3"].shape[1]                 # = 2 * data_dim
    D = D2 // 2
    tm = _pick_tile(B, tile_m)
    grid = (pl.cdiv(B, tm),)

    row = lambda i: (i, 0)                 # activation tiles walk the batch
    rep = lambda i: (0, 0)                 # weights: same block -> VMEM-resident

    out = pl.pallas_call(
        functools.partial(_decoder_gaussian_kernel, data_dim=D),
        grid=grid,
        in_specs=[
            pl.BlockSpec((tm, L), row),    # z
            pl.BlockSpec((tm, D), row),    # eps
            pl.BlockSpec((L, H), rep),     # w1 (bf16)
            pl.BlockSpec((H, H), rep),     # w2 (bf16)
            pl.BlockSpec((H, D2), rep),    # w3 (bf16, unsplit head)
            pl.BlockSpec((4, H), rep),     # packed (s1, t1, s2, t2) f32
            pl.BlockSpec((1, D2), rep),    # b3 f32
        ],
        out_specs=pl.BlockSpec((tm, 3 * D), row),
        out_shape=jax.ShapeDtypeStruct((B, 3 * D), jnp.float32),
        compiler_params=pltpu.CompilerParams(
            dimension_semantics=("parallel",),
            vmem_limit_bytes=32 * 1024 * 1024),
    )(z, eps, fp["w1"], fp["w2"], fp["w3"], fp["vecs"], fp["b3"])

    return out[:, :D], out[:, D:2 * D], out[:, 2 * D:]   # xs, mu, logvar


def decoder_mlp_deterministic(fp, z, *, tile_m=512):
    B, L = z.shape
    H = fp["w1"].shape[1]
    D = fp["w3"].shape[1]
    tm = _pick_tile(B, tile_m)
    grid = (pl.cdiv(B, tm),)
    row = lambda i: (i, 0)
    rep = lambda i: (0, 0)

    return pl.pallas_call(
        _decoder_det_kernel,
        grid=grid,
        in_specs=[
            pl.BlockSpec((tm, L), row),
            pl.BlockSpec((L, H), rep),
            pl.BlockSpec((H, H), rep),
            pl.BlockSpec((H, D), rep),
            pl.BlockSpec((4, H), rep),
            pl.BlockSpec((1, D), rep),
        ],
        out_specs=pl.BlockSpec((tm, D), row),
        out_shape=jax.ShapeDtypeStruct((B, D), jnp.float32),
        compiler_params=pltpu.CompilerParams(
            dimension_semantics=("parallel",),
            vmem_limit_bytes=32 * 1024 * 1024),
    )(z, fp["w1"], fp["w2"], fp["w3"], fp["vecs"], fp["b3"])


def decoder_mlp_forward(fp, z, *, dist="gaussian", eps=None, mean=False, stats=False):
    """Mirrors DecoderMLP.forward(z, mean, stats)."""
    if dist == "gaussian":
        xs, mu, lv = decoder_mlp_gaussian(fp, z, eps)
        if stats:
            return xs, mu, lv
        if mean:
            return mu
        return xs
    assert dist == "deterministic"
    return decoder_mlp_deterministic(fp, z)


# ---------------------------------------------------------------------------
# Parameters: raw (PyTorch-like) + host-side fold of eval-mode BatchNorm1d
# ---------------------------------------------------------------------------
def init_raw_params(key, latent_dim, hidden_dim, data_dim, dist="gaussian"):
    ks = iter(jax.random.split(key, 16))

    def lin(din, dout, scale=0.08):
        return {"w": scale * jax.random.normal(next(ks), (din, dout), jnp.float32),
                "b": 0.02 * jax.random.normal(next(ks), (dout,), jnp.float32)}

    def bn(dim):
        return {"gamma": 1.0 + 0.1 * jax.random.normal(next(ks), (dim,), jnp.float32),
                "beta": 0.05 * jax.random.normal(next(ks), (dim,), jnp.float32),
                "mean": 0.05 * jax.random.normal(next(ks), (dim,), jnp.float32),
                "var": 0.9 + 0.2 * jax.random.uniform(next(ks), (dim,), jnp.float32)}

    out_dim = data_dim * 2 if dist == "gaussian" else data_dim
    return {"lin1": lin(latent_dim, hidden_dim), "bn1": bn(hidden_dim),
            "lin2": lin(hidden_dim, hidden_dim), "bn2": bn(hidden_dim),
            "lin3": lin(hidden_dim, out_dim)}


def fold_params(raw, bn_eps=1e-5, weight_dtype=jnp.bfloat16):
    """Fold Linear bias + eval-mode BN into per-feature (scale, shift), pack the four
    H-length vectors into one (4, H) array, cast matmul weights to bf16, keep the
    final head weight UNSPLIT (mu/logvar are split by static lane slices in-kernel)."""
    def fold(lin, bnp):
        s = bnp["gamma"] / jnp.sqrt(bnp["var"] + bn_eps)
        shift = (lin["b"] - bnp["mean"]) * s + bnp["beta"]
        return lin["w"].astype(weight_dtype), s, shift

    w1, s1, t1 = fold(raw["lin1"], raw["bn1"])
    w2, s2, t2 = fold(raw["lin2"], raw["bn2"])
    vecs = jnp.stack([s1, t1, s2, t2], axis=0).astype(jnp.float32)     # (4, H)
    w3 = raw["lin3"]["w"].astype(weight_dtype)                         # (H, 2D or D)
    b3 = raw["lin3"]["b"].reshape(1, -1).astype(jnp.float32)
    return {"w1": w1, "w2": w2, "w3": w3, "vecs": vecs, "b3": b3}


# ---------------------------------------------------------------------------
# Pure-jnp reference (RAW f32 params; eval-mode BN)
# ---------------------------------------------------------------------------
def reference_forward(raw, z, eps, data_dim, dist="gaussian", bn_eps=1e-5):
    def bn(x, p):
        return p["gamma"] * (x - p["mean"]) / jnp.sqrt(p["var"] + bn_eps) + p["beta"]

    h = jax.nn.relu(bn(z @ raw["lin1"]["w"] + raw["lin1"]["b"], raw["bn1"]))
    h = jax.nn.relu(bn(h @ raw["lin2"]["w"] + raw["lin2"]["b"], raw["bn2"]))
    o = h @ raw["lin3"]["w"] + raw["lin3"]["b"]
    if dist != "gaussian":
        return o
    mu, lv = o[:, :data_dim], o[:, data_dim:]
    return mu + jnp.exp(0.5 * lv) * eps, mu, lv


# ---------------------------------------------------------------------------
# Main
# ---------------------------------------------------------------------------
if __name__ == "__main__":
    B, latent_dim, hidden_dim, data_dim = 8, 16, 128, 4   # H=128 -> lane-dense hidden

    key = jax.random.PRNGKey(0)
    kp, kp2, kz, ke = jax.random.split(key, 4)

    z = jax.random.normal(kz, (B, latent_dim), dtype=jnp.float32)
    eps = jax.random.normal(ke, (B, data_dim), dtype=jnp.float32)   # reparameterize noise

    # --- gaussian decoder (module default) ---
    raw_g = init_raw_params(kp, latent_dim, hidden_dim, data_dim, dist="gaussian")
    fp_g = fold_params(raw_g)
    fwd_g = jax.jit(functools.partial(decoder_mlp_forward, fp_g, dist="gaussian", stats=True))
    xs, mu, lv = fwd_g(z, eps=eps)
    jax.block_until_ready((xs, mu, lv))
    assert xs.shape == (B, data_dim) and mu.shape == (B, data_dim) and lv.shape == (B, data_dim)

    rxs, rmu, rlv = reference_forward(raw_g, z, eps, data_dim, dist="gaussian")
    err_g = max(float(jnp.max(jnp.abs(xs - rxs))),
                float(jnp.max(jnp.abs(mu - rmu))),
                float(jnp.max(jnp.abs(lv - rlv))))
    assert err_g < 3e-2, f"gaussian max abs error {err_g}"   # loose tol: bf16 weights

    # --- deterministic decoder ---
    raw_d = init_raw_params(kp2, latent_dim, hidden_dim, data_dim, dist="deterministic")
    fp_d = fold_params(raw_d)
    fwd_d = jax.jit(functools.partial(decoder_mlp_forward, fp_d, dist="deterministic"))
    o = fwd_d(z)
    jax.block_until_ready(o)
    assert o.shape == (B, data_dim)

    ro = reference_forward(raw_d, z, None, data_dim, dist="deterministic")
    err_d = float(jnp.max(jnp.abs(o - ro)))
    assert err_d < 3e-2, f"deterministic max abs error {err_d}"

    print("KERNEL_OK")
</pallas_src>

<mosaic_0001>
module attributes {stable_mosaic.version = 11 : i64} {
  func.func @_decoder_gaussian_kernel(%arg0: i32, %arg1: memref<8x16xf32, #tpu.memory_space<vmem>>, %arg2: memref<8x4xf32, #tpu.memory_space<vmem>>, %arg3: memref<16x128xbf16, #tpu.memory_space<vmem>>, %arg4: memref<128x128xbf16, #tpu.memory_space<vmem>>, %arg5: memref<128x8xbf16, #tpu.memory_space<vmem>>, %arg6: memref<4x128xf32, #tpu.memory_space<vmem>>, %arg7: memref<1x8xf32, #tpu.memory_space<vmem>>, %arg8: memref<8x12xf32, #tpu.memory_space<vmem>>) attributes {dimension_semantics = [#tpu.dimension_semantics<parallel>], iteration_bounds = array<i64: 1>, scalar_prefetch = 0 : i64, scratch_operands = 0 : i64, tpu.core_type = #tpu.core_type<tc>, window_params = [{transform_indices = @transform_0, window_bounds = array<i64: 8, 16>}, {transform_indices = @transform_1, window_bounds = array<i64: 8, 4>}, {pipeline_mode = #tpu.pipeline_mode<synchronous>, transform_indices = @transform_2, window_bounds = array<i64: 16, 128>}, {pipeline_mode = #tpu.pipeline_mode<synchronous>, transform_indices = @transform_3, window_bounds = array<i64: 128, 128>}, {pipeline_mode = #tpu.pipeline_mode<synchronous>, transform_indices = @transform_4, window_bounds = array<i64: 128, 8>}, {pipeline_mode = #tpu.pipeline_mode<synchronous>, transform_indices = @transform_5, window_bounds = array<i64: 4, 128>}, {pipeline_mode = #tpu.pipeline_mode<synchronous>, transform_indices = @transform_6, window_bounds = array<i64: 1, 8>}, {transform_indices = @transform_7, window_bounds = array<i64: 8, 12>}]} {
    %c0 = arith.constant 0 : index
    %c0_0 = arith.constant 0 : index
    %0 = vector.load %arg6[%c0, %c0_0] : memref<4x128xf32, #tpu.memory_space<vmem>>, vector<4x128xf32>
    %1 = vector.extract_strided_slice %0 {offsets = [0, 0], sizes = [1, 128], strides = [1, 1]} : vector<4x128xf32> to vector<1x128xf32>
    %2 = vector.extract_strided_slice %0 {offsets = [1, 0], sizes = [1, 128], strides = [1, 1]} : vector<4x128xf32> to vector<1x128xf32>
    %3 = vector.extract_strided_slice %0 {offsets = [2, 0], sizes = [1, 128], strides = [1, 1]} : vector<4x128xf32> to vector<1x128xf32>
    %4 = vector.extract_strided_slice %0 {offsets = [3, 0], sizes = [1, 128], strides = [1, 1]} : vector<4x128xf32> to vector<1x128xf32>
    %c0_1 = arith.constant 0 : index
    %c0_2 = arith.constant 0 : index
    %5 = vector.load %arg1[%c0_1, %c0_2] : memref<8x16xf32, #tpu.memory_space<vmem>>, vector<8x16xf32>
    %6 = arith.truncf %5 : vector<8x16xf32> to vector<8x16xbf16>
    %c0_3 = arith.constant 0 : index
    %c0_4 = arith.constant 0 : index
    %7 = vector.load %arg3[%c0_3, %c0_4] : memref<16x128xbf16, #tpu.memory_space<vmem>>, vector<16x128xbf16>
    %cst = arith.constant dense<0.000000e+00> : vector<8x128xf32>
    %8 = tpu.matmul %6, %7, %cst {dimension_numbers = #tpu.dot_dimension_numbers<[1], [0], [0], [1], [0, 0, 1, 1], [], []>} : vector<8x16xbf16>, vector<16x128xbf16>, vector<8x128xf32> -> vector<8x128xf32>
    %9 = vector.broadcast %1 : vector<1x128xf32> to vector<8x128xf32>
    %10 = arith.mulf %8, %9 : vector<8x128xf32>
    %11 = vector.broadcast %2 : vector<1x128xf32> to vector<8x128xf32>
    %12 = arith.addf %10, %11 : vector<8x128xf32>
    %cst_5 = arith.constant 0.000000e+00 : f32
    %13 = vector.broadcast %cst_5 : f32 to vector<8x128xf32>
    %14 = arith.maximumf %12, %13 : vector<8x128xf32>
    %15 = arith.truncf %14 : vector<8x128xf32> to vector<8x128xbf16>
    %c0_6 = arith.constant 0 : index
    %c0_7 = arith.constant 0 : index
    %16 = vector.load %arg4[%c0_6, %c0_7] : memref<128x128xbf16, #tpu.memory_space<vmem>>, vector<128x128xbf16>
    %cst_8 = arith.constant dense<0.000000e+00> : vector<8x128xf32>
    %17 = tpu.matmul %15, %16, %cst_8 {dimension_numbers = #tpu.dot_dimension_numbers<[1], [0], [0], [1], [0, 0, 1, 1], [], []>} : vector<8x128xbf16>, vector<128x128xbf16>, vector<8x128xf32> -> vector<8x128xf32>
    %18 = vector.broadcast %3 : vector<1x128xf32> to vector<8x128xf32>
    %19 = arith.mulf %17, %18 : vector<8x128xf32>
    %20 = vector.broadcast %4 : vector<1x128xf32> to vector<8x128xf32>
    %21 = arith.addf %19, %20 : vector<8x128xf32>
    %cst_9 = arith.constant 0.000000e+00 : f32
    %22 = vector.broadcast %cst_9 : f32 to vector<8x128xf32>
    %23 = arith.maximumf %21, %22 : vector<8x128xf32>
    %24 = arith.truncf %23 : vector<8x128xf32> to vector<8x128xbf16>
    %c0_10 = arith.constant 0 : index
    %c0_11 = arith.constant 0 : index
    %25 = vector.load %arg5[%c0_10, %c0_11] : memref<128x8xbf16, #tpu.memory_space<vmem>>, vector<128x8xbf16>
    %cst_12 = arith.constant dense<0.000000e+00> : vector<8x8xf32>
    %26 = tpu.matmul %24, %25, %cst_12 {dimension_numbers = #tpu.dot_dimension_numbers<[1], [0], [0], [1], [0, 0, 1, 1], [], []>} : vector<8x128xbf16>, vector<128x8xbf16>, vector<8x8xf32> -> vector<8x8xf32>
    %c0_13 = arith.constant 0 : index
    %c0_14 = arith.constant 0 : index
    %27 = vector.load %arg7[%c0_13, %c0_14] : memref<1x8xf32, #tpu.memory_space<vmem>>, vector<1x8xf32>
    %28 = vector.broadcast %27 : vector<1x8xf32> to vector<8x8xf32>
    %29 = arith.addf %26, %28 : vector<8x8xf32>
    %30 = vector.extract_strided_slice %29 {offsets = [0, 0], sizes = [8, 4], strides = [1, 1]} : vector<8x8xf32> to vector<8x4xf32>
    %31 = vector.extract_strided_slice %29 {offsets = [0, 4], sizes = [8, 4], strides = [1, 1]} : vector<8x8xf32> to vector<8x4xf32>
    %cst_15 = arith.constant 5.000000e-01 : f32
    %32 = vector.broadcast %cst_15 : f32 to vector<8x4xf32>
    %33 = arith.mulf %32, %31 : vector<8x4xf32>
    %34 = math.exp %33 : vector<8x4xf32>
    %c0_16 = arith.constant 0 : index
    %c0_17 = arith.constant 0 : index
    %35 = vector.load %arg2[%c0_16, %c0_17] : memref<8x4xf32, #tpu.memory_space<vmem>>, vector<8x4xf32>
    %36 = arith.mulf %34, %35 : vector<8x4xf32>
    %37 = arith.addf %30, %36 : vector<8x4xf32>
    %38 = tpu.concatenate %37, %30, %31 in 1 : vector<8x4xf32>, vector<8x4xf32>, vector<8x4xf32> -> vector<8x12xf32>
    %c0_18 = arith.constant 0 : index
    %c0_19 = arith.constant 0 : index
    %39 = vector.load %arg8[%c0_18, %c0_19] : memref<8x12xf32, #tpu.memory_space<vmem>>, vector<8x12xf32>
    tpu.vector_store %arg8[%c0_18, %c0_19], %38 {strides = array<i32>} : memref<8x12xf32, #tpu.memory_space<vmem>>, vector<8x12xf32>,
    return
  }
  func.func @transform_0(%arg0: i32) -> (i32, i32) {
    %c0_i32 = arith.constant 0 : i32
    %c0_i32_0 = arith.constant 0 : i32
    return %arg0, %c0_i32 : i32, i32
  }
  func.func @transform_1(%arg0: i32) -> (i32, i32) {
    %c0_i32 = arith.constant 0 : i32
    %c0_i32_0 = arith.constant 0 : i32
    return %arg0, %c0_i32 : i32, i32
  }
  func.func @transform_2(%arg0: i32) -> (i32, i32) {
    %c0_i32 = arith.constant 0 : i32
    %c0_i32_0 = arith.constant 0 : i32
    %c0_i32_1 = arith.constant 0 : i32
    return %c0_i32, %c0_i32_0 : i32, i32
  }
  func.func @transform_3(%arg0: i32) -> (i32, i32) {
    %c0_i32 = arith.constant 0 : i32
    %c0_i32_0 = arith.constant 0 : i32
    %c0_i32_1 = arith.constant 0 : i32
    return %c0_i32, %c0_i32_0 : i32, i32
  }
  func.func @transform_4(%arg0: i32) -> (i32, i32) {
    %c0_i32 = arith.constant 0 : i32
    %c0_i32_0 = arith.constant 0 : i32
    %c0_i32_1 = arith.constant 0 : i32
    return %c0_i32, %c0_i32_0 : i32, i32
  }
  func.func @transform_5(%arg0: i32) -> (i32, i32) {
    %c0_i32 = arith.constant 0 : i32
    %c0_i32_0 = arith.constant 0 : i32
    %c0_i32_1 = arith.constant 0 : i32
    return %c0_i32, %c0_i32_0 : i32, i32
  }
  func.func @transform_6(%arg0: i32) -> (i32, i32) {
    %c0_i32 = arith.constant 0 : i32
    %c0_i32_0 = arith.constant 0 : i32
    %c0_i32_1 = arith.constant 0 : i32
    return %c0_i32, %c0_i32_0 : i32, i32
  }
  func.func @transform_7(%arg0: i32) -> (i32, i32) {
    %c0_i32 = arith.constant 0 : i32
    %c0_i32_0 = arith.constant 0 : i32
    return %arg0, %c0_i32 : i32, i32
  }
}

</mosaic_0001>

<llo_original>
// kernel: decoder_mlp_forward.1
$region0: #{decoder_mlp_forward.1}
  #allocation0 [shape = 'u32[]', space=smem, size = 0x4, offset = 0x4, fixed_abs, tag = 'smem constant byte address 0x4 - core index']
  #allocation1 [shape = 'u32[144,128]{1,0:T(1,128)}', space=vmem, size = 0x12000, scoped, tag = 'internal scratch']
  %s0 = inlined_call_operand.vmem [shape: f32[8,16], index: 0, kind: input, shape index: {}]
  %s1 = inlined_call_operand.vmem [shape: f32[8,4], index: 1, kind: input, shape index: {}]
  %s2 = inlined_call_operand.hbm [shape: bf16[16,128], index: 2, kind: input, shape index: {}]
  %s3 = inlined_call_operand.hbm [shape: bf16[128,128], index: 3, kind: input, shape index: {}]
  %s4 = inlined_call_operand.hbm [shape: bf16[128,8], index: 4, kind: input, shape index: {}]
  %s5 = inlined_call_operand.vmem [shape: f32[4,128], index: 5, kind: input, shape index: {}]
  %s6 = inlined_call_operand.vmem [shape: f32[1,8], index: 6, kind: input, shape index: {}]
  %s7 = inlined_call_operand.vmem [shape: f32[8,12], index: 7, kind: output, shape index: {}]
  %s8 = sld [smem:[#allocation0]]
  $region50: #{decoder_mlp_forward.1} parent=0
    _
  %s10 = ssub.s32 1, %s8
  %s11 = scalar_select 0, %s10, %s8
  $region1: #{decoder_mlp_forward.1} parent=0
    #allocation2 [shape = 'u8[4096]{0}', space=vmem, size = 0x1000, scoped, tag = 'input window, operand 2, single buffered']
    #allocation3 [shape = 's32[1]{0}', space=sflag, size = 0x4, scoped, tag = 'scoped memory for decoder_mlp_forward.1']
    #allocation4 [shape = 'u8[32768]{0}', space=vmem, size = 0x8000, scoped, tag = 'input window, operand 3, single buffered']
    #allocation5 [shape = 's32[1]{0}', space=sflag, size = 0x4, scoped, tag = 'scoped memory for decoder_mlp_forward.1']
    #allocation6 [shape = 'u8[32768]{0}', space=vmem, size = 0x8000, scoped, tag = 'input window, operand 4, single buffered']
    %12 = vsyncpa [#allocation3], 0
    %13 = vsyncpa [#allocation5], 0
    // Predicated region
    $region2: #{decoder_mlp_forward.1} parent=1 // pred_check
      _
    $region3: #{decoder_mlp_forward.1} parent=1 // pred_check_branch
      %15 = sbr.rel (0) target = $region5
    $region4: #{decoder_mlp_forward.1} parent=1 // pred_region
      _
    $region5: #{decoder_mlp_forward.1} parent=1 // pred_fallthru
      _
    // Predicated region
    $region6: #{decoder_mlp_forward.1} parent=1 // pred_check
      _
    $region7: #{decoder_mlp_forward.1} parent=1 // pred_check_branch
      %17 = sbr.rel (0) target = $region9
    $region8: #{decoder_mlp_forward.1} parent=1 // pred_region
      _
    $region9: #{decoder_mlp_forward.1} parent=1 // pred_fallthru
      _
    // Predicated region
    $region10: #{decoder_mlp_forward.1} parent=1 // pred_check
      _
    $region11: #{decoder_mlp_forward.1} parent=1 // pred_check_branch
      %19 = sbr.rel (0) target = $region13
    $region12: #{decoder_mlp_forward.1} parent=1 // pred_region
      %s21 = ssub.s32 128, 128
      %22 = vsyncadd [#allocation3], %s21
      %s23 = sshll.u32 [#allocation2], 4
      %s24 = int_to_ptr.vmem [resolvable:$true] %s23
      %29 = dma.hbm_to_vmem [thread:$0]  %s2, 128, %s24, [#allocation3], 64, 64, 4
    $region13: #{decoder_mlp_forward.1} parent=1 // pred_fallthru
      _
    // Predicated region
    $region14: #{decoder_mlp_forward.1} parent=1 // pred_check
      _
    $region15: #{decoder_mlp_forward.1} parent=1 // pred_check_branch
      %31 = sbr.rel (0) target = $region17
    $region16: #{decoder_mlp_forward.1} parent=1 // pred_region
      %s33 = ssub.s32 1024, 1024
      %34 = vsyncadd [#allocation5], %s33
      %s35 = sshll.u32 [#allocation4], 4
      %s36 = int_to_ptr.vmem [resolvable:$true] %s35
      %41 = dma.hbm_to_vmem [thread:$0]  %s3, 1024, %s36, [#allocation5], 64, 64, 4
    $region17: #{decoder_mlp_forward.1} parent=1 // pred_fallthru
      _
    // Predicated region
    $region18: #{decoder_mlp_forward.1} parent=1 // pred_check
      _
    $region19: #{decoder_mlp_forward.1} parent=1 // pred_check_branch
      %43 = sbr.rel (0) target = $region21
    $region20: #{decoder_mlp_forward.1} parent=1 // pred_region
      %s45 = ssub.s32 1024, 1024
      %46 = vsyncadd [#allocation5], %s45
      %s47 = sshll.u32 [#allocation6], 4
      %s48 = int_to_ptr.vmem [resolvable:$true] %s47
      %53 = dma.hbm_to_vmem [thread:$0]  %s4, 1024, %s48, [#allocation5], 64, 64, 4
    $region21: #{decoder_mlp_forward.1} parent=1 // pred_fallthru
      _
    // Predicated region
    $region22: #{decoder_mlp_forward.1} parent=1 // pred_check
      _
    $region23: #{decoder_mlp_forward.1} parent=1 // pred_check_branch
      %55 = sbr.rel (0) target = $region25
    $region24: #{decoder_mlp_forward.1} parent=1 // pred_region
      _
    $region25: #{decoder_mlp_forward.1} parent=1 // pred_fallthru
      _
    // Predicated region
    $region26: #{decoder_mlp_forward.1} parent=1 // pred_check
      _
    $region27: #{decoder_mlp_forward.1} parent=1 // pred_check_branch
      %57 = sbr.rel (0) target = $region29
    $region28: #{decoder_mlp_forward.1} parent=1 // pred_region
      _
    $region29: #{decoder_mlp_forward.1} parent=1 // pred_fallthru
      _
    // Predicated region
    $region30: #{decoder_mlp_forward.1} parent=1 // pred_check
      _
    $region31: #{decoder_mlp_forward.1} parent=1 // pred_check_branch
      %59 = sbr.rel (0) target = $region33
    $region32: #{decoder_mlp_forward.1} parent=1 // pred_region
      %60 = dma.done [#allocation3], 128
    $region33: #{decoder_mlp_forward.1} parent=1 // pred_fallthru
      _
    // Predicated region
    $region34: #{decoder_mlp_forward.1} parent=1 // pred_check
      _
    $region35: #{decoder_mlp_forward.1} parent=1 // pred_check_branch
      %62 = sbr.rel (0) target = $region37
    $region36: #{decoder_mlp_forward.1} parent=1 // pred_region
      %63 = dma.done [#allocation5], 1024
    $region37: #{decoder_mlp_forward.1} parent=1 // pred_fallthru
      _
    // Predicated region
    $region38: #{decoder_mlp_forward.1} parent=1 // pred_check
      _
    $region39: #{decoder_mlp_forward.1} parent=1 // pred_check_branch
      %65 = sbr.rel (0) target = $region41
    $region40: #{decoder_mlp_forward.1} parent=1 // pred_region
      %66 = dma.done [#allocation5], 1024
    $region41: #{decoder_mlp_forward.1} parent=1 // pred_fallthru
      _
    %v68 = vld [vmem:[%s5] sm:$0xf]
    %v69 = vld [vmem:[%s0] sm:$0xff]
    %v70 = vpack.c.bf16 %v69, %v69
    %v71 = vld [vmem:[#allocation2] sm:$0xf]
    %v72 = vld [vmem:[#allocation2 + $0x4] sm:$0xf]
    %v75 = vunpack.c.l.b16 %v71
    %v76 = vunpack.c.l.b16 %v72
    %v77 = vpack.c.b16 %v76, %v75
    %vm79 = vcmask 130048
    %v81 = vsel %vm79, %v70, 0
    %83 = vmatprep.subr.bf16.mxu0 0
    %84 = vmatpush1.bf16.msra.mxu0 0
    %85 = vmatprep.subr.bf16.mxu0 0
    %86 = vmatpush1.bf16.msra.mxu0 0
    %87 = vmatprep.subr.bf16.mxu0 0
    %88 = vmatpush1.bf16.msra.mxu0 0
    %89 = vmatprep.subr.bf16.mxu0 0
    %90 = vmatpush1.bf16.msra.mxu0 0
    %91 = vmatprep.subr.bf16.mxu0 0
    %92 = vmatpush1.bf16.msra.mxu0 0
    %93 = vmatprep.subr.bf16.mxu0 0
    %94 = vmatpush1.bf16.msra.mxu0 0
    %95 = vmatprep.subr.bf16.mxu0 0
    %96 = vmatpush1.bf16.msra.mxu0 0
    %97 = vmatprep.subr.bf16.mxu0 0
    %98 = vmatpush1.bf16.msra.mxu0 %v77
    %99 = vmatprep.subr.bf16.mxu0 0
    %100 = vmatpush2.bf16.msra.mxu0 0
    %101 = vmatprep.subr.bf16.mxu0 0
    %102 = vmatpush2.bf16.msra.mxu0 0
    %103 = vmatprep.subr.bf16.mxu0 0
    %104 = vmatpush2.bf16.msra.mxu0 0
    %105 = vmatprep.subr.bf16.mxu0 0
    %106 = vmatpush2.bf16.msra.mxu0 0
    %107 = vmatprep.subr.bf16.mxu0 0
    %108 = vmatpush2.bf16.msra.mxu0 0
    %109 = vmatprep.subr.bf16.mxu0 0
    %110 = vmatpush2.bf16.msra.mxu0 0
    %111 = vmatprep.subr.bf16.mxu0 0
    %112 = vmatpush2.bf16.msra.mxu0 0
    %113 = vmatprep.subr.bf16.mxu0 0
    %114 = vmatpush2.bf16.msra.mxu0 0
    %115 = vmatprep.mubr.bf16.mxu0 0
    %116 = vmatmul.mubr.bf16.gmra.mxu0 %v81
    %v117 = vpop.f32.mrf.mxu0
    %v118 = vadd.f32 0.0, %v117
    %v119 = vpop.f32.mrf.mxu0
    %v120 = vpop.f32.mrf.mxu0
    %v121 = vpop.f32.mrf.mxu0
    %122 = vdwg.mxu0
    %v123 = vlaneseq
    %v124 = vshrl.u32 %v123, 7
    %v125 = vsub.s32 0, %v124
    %v126 = vrot.slane %v68, %v125
    %v127 = vmul.f32 %v118, %v126
    %v128 = vlaneseq
    %v129 = vshrl.u32 %v128, 7
    %v130 = vsub.s32 1, %v129
    %v131 = vrot.slane %v68, %v130
    %v132 = vadd.f32 %v127, %v131
    %v133 = vmax.f32 %v132, 0.0
    %v134 = vpack.c.bf16 %v133, %v133
    %v135 = vld [vmem:[#allocation4] sm:$0xf]
    %v136 = vld [vmem:[#allocation4 + $0x4] sm:$0xf]
    %v137 = vld [vmem:[#allocation4 + $0x8] sm:$0xf]
    %v138 = vld [vmem:[#allocation4 + $0xc] sm:$0xf]
    %v139 = vld [vmem:[#allocation4 + $0x10] sm:$0xf]
    %v140 = vld [vmem:[#allocation4 + $0x14] sm:$0xf]
    %v141 = vld [vmem:[#allocation4 + $0x18] sm:$0xf]
    %v142 = vld [vmem:[#allocation4 + $0x1c] sm:$0xf]
    %v143 = vld [vmem:[#allocation4 + $0x20] sm:$0xf]
    %v144 = vld [vmem:[#allocation4 + $0x24] sm:$0xf]
    %v145 = vld [vmem:[#allocation4 + $0x28] sm:$0xf]
    %v146 = vld [vmem:[#allocation4 + $0x2c] sm:$0xf]
    %v147 = vld [vmem:[#allocation4 + $0x30] sm:$0xf]
    %v148 = vld [vmem:[#allocation4 + $0x34] sm:$0xf]
    %v149 = vld [vmem:[#allocation4 + $0x38] sm:$0xf]
    %v150 = vld [vmem:[#allocation4 + $0x3c] sm:$0xf]
    %v167 = vunpack.c.l.b16 %v135
    %v168 = vunpack.c.l.b16 %v136
    %v169 = vunpack.c.l.b16 %v137
    %v170 = vunpack.c.l.b16 %v138
    %v171 = vunpack.c.l.b16 %v139
    %v172 = vunpack.c.l.b16 %v140
    %v173 = vunpack.c.l.b16 %v141
    %v174 = vunpack.c.l.b16 %v142
    %v175 = vunpack.c.l.b16 %v143
    %v176 = vunpack.c.l.b16 %v144
    %v177 = vunpack.c.l.b16 %v145
    %v178 = vunpack.c.l.b16 %v146
    %v179 = vunpack.c.l.b16 %v147
    %v180 = vunpack.c.l.b16 %v148
    %v181 = vunpack.c.l.b16 %v149
    %v182 = vunpack.c.l.b16 %v150
    %v183 = vpack.c.b16 %v168, %v167
    %v184 = vpack.c.b16 %v170, %v169
    %v185 = vpack.c.b16 %v172, %v171
    %v186 = vpack.c.b16 %v174, %v173
    %v187 = vpack.c.b16 %v176, %v175
    %v188 = vpack.c.b16 %v178, %v177
    %v189 = vpack.c.b16 %v180, %v179
    %v190 = vpack.c.b16 %v182, %v181
    %199 = vmatprep.subr.bf16.mxu0 0
    %200 = vmatpush1.bf16.msra.mxu0 %v190
    %201 = vmatprep.subr.bf16.mxu0 0
    %202 = vmatpush1.bf16.msra.mxu0 %v189
    %203 = vmatprep.subr.bf16.mxu0 0
    %204 = vmatpush1.bf16.msra.mxu0 %v188
    %205 = vmatprep.subr.bf16.mxu0 0
    %206 = vmatpush1.bf16.msra.mxu0 %v187
    %207 = vmatprep.subr.bf16.mxu0 0
    %208 = vmatpush1.bf16.msra.mxu0 %v186
    %209 = vmatprep.subr.bf16.mxu0 0
    %210 = vmatpush1.bf16.msra.mxu0 %v185
    %211 = vmatprep.subr.bf16.mxu0 0
    %212 = vmatpush1.bf16.msra.mxu0 %v184
    %213 = vmatprep.subr.bf16.mxu0 0
    %214 = vmatpush1.bf16.msra.mxu0 %v183
    %215 = vmatprep.subr.bf16.mxu0 0
    %216 = vmatpush2.bf16.msra.mxu0 0
    %217 = vmatprep.subr.bf16.mxu0 0
    %218 = vmatpush2.bf16.msra.mxu0 0
    %219 = vmatprep.subr.bf16.mxu0 0
    %220 = vmatpush2.bf16.msra.mxu0 0
    %221 = vmatprep.subr.bf16.mxu0 0
    %222 = vmatpush2.bf16.msra.mxu0 0
    %223 = vmatprep.subr.bf16.mxu0 0
    %224 = vmatpush2.bf16.msra.mxu0 0
    %225 = vmatprep.subr.bf16.mxu0 0
    %226 = vmatpush2.bf16.msra.mxu0 0
    %227 = vmatprep.subr.bf16.mxu0 0
    %228 = vmatpush2.bf16.msra.mxu0 0
    %229 = vmatprep.subr.bf16.mxu0 0
    %230 = vmatpush2.bf16.msra.mxu0 0
    %231 = vmatprep.mubr.bf16.mxu0 0
    %232 = vmatmul.mubr.bf16.gmra.mxu0 %v134
    %v233 = vpop.f32.mrf.mxu0
    %v234 = vadd.f32 0.0, %v233
    %v235 = vpop.f32.mrf.mxu0
    %v236 = vpop.f32.mrf.mxu0
    %v237 = vpop.f32.mrf.mxu0
    %238 = vdwg.mxu0
    %v239 = vlaneseq
    %v240 = vshrl.u32 %v239, 7
    %v241 = vsub.s32 2, %v240
    %v242 = vrot.slane %v68, %v241
    %v243 = vmul.f32 %v234, %v242
    %v244 = vlaneseq
    %v245 = vshrl.u32 %v244, 7
    %v246 = vsub.s32 3, %v245
    %v247 = vrot.slane %v68, %v246
    %v248 = vadd.f32 %v243, %v247
    %v249 = vmax.f32 %v248, 0.0
    %v250 = vpack.c.bf16 %v249, %v249
    %v251 = vld [vmem:[#allocation6] sm:$0xf]
    %v252 = vld [vmem:[#allocation6 + $0x4] sm:$0xf]
    %v253 = vld [vmem:[#allocation6 + $0x8] sm:$0xf]
    %v254 = vld [vmem:[#allocation6 + $0xc] sm:$0xf]
    %v255 = vld [vmem:[#allocation6 + $0x10] sm:$0xf]
    %v256 = vld [vmem:[#allocation6 + $0x14] sm:$0xf]
    %v257 = vld [vmem:[#allocation6 + $0x18] sm:$0xf]
    %v258 = vld [vmem:[#allocation6 + $0x1c] sm:$0xf]
    %v259 = vld [vmem:[#allocation6 + $0x20] sm:$0xf]
    %v260 = vld [vmem:[#allocation6 + $0x24] sm:$0xf]
    %v261 = vld [vmem:[#allocation6 + $0x28] sm:$0xf]
    %v262 = vld [vmem:[#allocation6 + $0x2c] sm:$0xf]
    %v263 = vld [vmem:[#allocation6 + $0x30] sm:$0xf]
    %v264 = vld [vmem:[#allocation6 + $0x34] sm:$0xf]
    %v265 = vld [vmem:[#allocation6 + $0x38] sm:$0xf]
    %v266 = vld [vmem:[#allocation6 + $0x3c] sm:$0xf]
    %v267 = vld [vmem:[%s6] sm:$0x1]
    %v269 = vlaneseq
    %v270 = vshrl.u32 %v269, 7
    %v271 = vsub.s32 0, %v270
    %v272 = vrot.slane %v267, %v271
    %v290 = vunpack.c.l.b16 %v251
    %v291 = vunpack.c.l.b16 %v252
    %v292 = vunpack.c.l.b16 %v253
    %v293 = vunpack.c.l.b16 %v254
    %v294 = vunpack.c.l.b16 %v255
    %v295 = vunpack.c.l.b16 %v256
    %v296 = vunpack.c.l.b16 %v257
    %v297 = vunpack.c.l.b16 %v258
    %v298 = vunpack.c.l.b16 %v259
    %v299 = vunpack.c.l.b16 %v260
    %v300 = vunpack.c.l.b16 %v261
    %v301 = vunpack.c.l.b16 %v262
    %v302 = vunpack.c.l.b16 %v263
    %v303 = vunpack.c.l.b16 %v264
    %v304 = vunpack.c.l.b16 %v265
    %v305 = vunpack.c.l.b16 %v266
    %v306 = vpack.c.b16 %v291, %v290
    %v307 = vpack.c.b16 %v293, %v292
    %v308 = vpack.c.b16 %v295, %v294
    %v309 = vpack.c.b16 %v297, %v296
    %v310 = vpack.c.b16 %v299, %v298
    %v311 = vpack.c.b16 %v301, %v300
    %v312 = vpack.c.b16 %v303, %v302
    %v313 = vpack.c.b16 %v305, %v304
    %322 = vmatprep.subr.bf16.mxu0 0
    %323 = vmatpush1.bf16.msra.mxu0 %v313
    %324 = vmatprep.subr.bf16.mxu0 0
    %325 = vmatpush1.bf16.msra.mxu0 %v312
    %326 = vmatprep.subr.bf16.mxu0 0
    %327 = vmatpush1.bf16.msra.mxu0 %v311
    %328 = vmatprep.subr.bf16.mxu0 0
    %329 = vmatpush1.bf16.msra.mxu0 %v310
    %330 = vmatprep.subr.bf16.mxu0 0
    %331 = vmatpush1.bf16.msra.mxu0 %v309
    %332 = vmatprep.subr.bf16.mxu0 0
    %333 = vmatpush1.bf16.msra.mxu0 %v308
    %334 = vmatprep.subr.bf16.mxu0 0
    %335 = vmatpush1.bf16.msra.mxu0 %v307
    %336 = vmatprep.subr.bf16.mxu0 0
    %337 = vmatpush1.bf16.msra.mxu0 %v306
    %338 = vmatprep.subr.bf16.mxu0 0
    %339 = vmatpush2.bf16.msra.mxu0 0
    %340 = vmatprep.subr.bf16.mxu0 0
    %341 = vmatpush2.bf16.msra.mxu0 0
    %342 = vmatprep.subr.bf16.mxu0 0
    %343 = vmatpush2.bf16.msra.mxu0 0
    %344 = vmatprep.subr.bf16.mxu0 0
    %345 = vmatpush2.bf16.msra.mxu0 0
    %346 = vmatprep.subr.bf16.mxu0 0
    %347 = vmatpush2.bf16.msra.mxu0 0
    %348 = vmatprep.subr.bf16.mxu0 0
    %349 = vmatpush2.bf16.msra.mxu0 0
    %350 = vmatprep.subr.bf16.mxu0 0
    %351 = vmatpush2.bf16.msra.mxu0 0
    %352 = vmatprep.subr.bf16.mxu0 0
    %353 = vmatpush2.bf16.msra.mxu0 0
    %354 = vmatprep.mubr.bf16.mxu0 0
    %355 = vmatmul.mubr.bf16.gmra.mxu0 %v250
    %v356 = vpop.f32.mrf.mxu0
    %v357 = vadd.f32 %v272, %v356
    %v358 = vpop.f32.mrf.mxu0
    %v359 = vpop.f32.mrf.mxu0
    %v360 = vpop.f32.mrf.mxu0
    %361 = vdwg.mxu0
    %v362 = vmul.f32 %v357, 0.5
    %v363 = vmul.f32 %v362, 1.442695
    %v364 = vpow.pop %v363
    %v365 = vld [vmem:[%s1] sm:$0xff]
    %367 = vrot.lane.b32.xlu0 %v365, 4
    %v368 = vpop.permute.xlu0 %367
    %v370 = vmul.f32 %v364, %v368
    %372 = vrot.lane.b32.xlu0 %v370, 124
    %v373 = vpop.permute.xlu0 %372
    %v375 = vadd.f32 %v357, %v373
    %377 = vrot.lane.b32.xlu0 %v357, 4
    %v378 = vpop.permute.xlu0 %377
    %vm380 = vcmask 31744
    %v381 = vsel %vm380, %v375, %v378
    %vm382 = vcmask 64512
    %v383 = vsel %vm382, %v381, %v378
    %vm384 = vcmask 97280
    %385 = vst.msk [vmem:[%s7] sm:$0xff] %vm384, %v383
    // Predicated region
    $region42: #{decoder_mlp_forward.1} parent=1 // pred_check
      _
    $region43: #{decoder_mlp_forward.1} parent=1 // pred_check_branch
      %387 = sbr.rel (0) target = $region45
    $region44: #{decoder_mlp_forward.1} parent=1 // pred_region
      _
    $region45: #{decoder_mlp_forward.1} parent=1 // pred_fallthru
      _
    // Predicated region
    $region46: #{decoder_mlp_forward.1} parent=1 // pred_check
      _
    $region47: #{decoder_mlp_forward.1} parent=1 // pred_check_branch
      %389 = sbr.rel (0) target = $region49
    $region48: #{decoder_mlp_forward.1} parent=1 // pred_region
      _
    $region49: #{decoder_mlp_forward.1} parent=1 // pred_fallthru
      _
    %390 = vsyncpa [#allocation3], 1
    %391 = vsyncpa [#allocation5], 1

</llo_original>
